<compile_context>
chip_gen: v6e
topology: v6e:2x2x1
jax: 0.10.0
libtpu: 0.0.40
codegen_flags: <defaults>
</compile_context>

<pallas_src>
from functools import partial

import jax
import jax.numpy as jnp
from jax.experimental import pallas as pl
from jax.experimental.pallas import tpu as pltpu


def _transition_kernel(x_ref, w_ref, b_ref, o_ref):
    # x_ref: (K, TM, Cin)   bf16 pooling-tap pixels for this tile
    # w_ref: (Cin, CoutP)   bf16 weight, BN scale and 1/K already folded in
    # b_ref: (1, CoutP)     f32 folded bias (already divided by K)
    # o_ref: (TM, CoutP)
    K, TM, Cin = x_ref.shape

    # One big matmul per tile: collapse the tap axis into rows (leading-dim
    # collapse; TM is a multiple of 8 so the sublane tiling is preserved).
    x = x_ref[...].reshape(K * TM, Cin)
    y = jnp.dot(x, w_ref[...], preferred_element_type=jnp.float32)

    # BN bias + ReLU in f32 (per tap, pre-pool).  Bias broadcast happens once.
    y = jnp.maximum(y + b_ref[...], 0.0)

    # 2x2 average pool == sum of the K taps (the 1/K is folded into w/b).
    if K == 1:
        out = y
    else:
        out = y[0:TM]
        for k in range(1, K):
            out = out + y[k * TM:(k + 1) * TM]

    o_ref[...] = out.astype(o_ref.dtype)


def _pick_tile_rows(M, per_row_bytes, budget_bytes, max_rows=2048):
    """Largest row-tile (multiple of 8, preferably dividing M) within budget."""
    cap = int(min(max_rows, max(8, budget_bytes // max(per_row_bytes, 1))))
    if M <= cap:
        return M
    tm = (cap // 8) * 8
    t = tm
    while t >= 8 and M % t:
        t -= 8
    return t if t >= 8 else tm  # fallback: partial last block (Pallas masks it)


@partial(jax.jit, static_argnames=("with_pooling", "tile_rows"))
def transition_block(x_nchw, conv_w, bn_gamma, bn_beta, bn_mean, bn_var,
                     with_pooling=True, eps=1e-5, tile_rows=None):
    """Pallas implementation of TransitionBlock.forward (eval-mode BN)."""
    N, Cin, H, W = x_nchw.shape
    Cout = conv_w.shape[0]
    out_dtype = x_nchw.dtype

    K = 4 if with_pooling else 1

    # Fold BN (eval mode) and the 1/K pooling mean into weight/bias (f32 fold,
    # then cast weight to bf16 for the MXU).
    scale = (bn_gamma / jnp.sqrt(bn_var + eps)).astype(jnp.float32)
    bias = ((bn_beta - bn_mean * scale) / K).astype(jnp.float32)
    wt = conv_w.reshape(Cout, Cin).T.astype(jnp.float32) * (scale / K)[None, :]

    # Pad Cout to a lane-dense multiple of 128 (sliced off after the kernel).
    CoutP = ((Cout + 127) // 128) * 128
    if CoutP != Cout:
        wt = jnp.pad(wt, ((0, 0), (0, CoutP - Cout)))
        bias = jnp.pad(bias, ((0, CoutP - Cout),))
    wt = wt.astype(jnp.bfloat16)
    bias2 = bias.reshape(1, CoutP)

    # NCHW -> (K, M, Cin) with channels minor.  Under jit this whole shuffle
    # fuses into the single NCHW -> channels-last copy that the kernel needs
    # regardless, so it does not add an extra HBM round-trip.
    x_nhwc = jnp.transpose(x_nchw, (0, 2, 3, 1))
    if with_pooling:
        Ho, Wo = H // 2, W // 2  # floor, matches AvgPool2d(ceil_mode=False)
        xr = x_nhwc[:, :2 * Ho, :2 * Wo, :].reshape(N, Ho, 2, Wo, 2, Cin)
        xr = jnp.transpose(xr, (2, 4, 0, 1, 3, 5)).reshape(K, N * Ho * Wo, Cin)
    else:
        Ho, Wo = H, W
        xr = x_nhwc.reshape(1, N * Ho * Wo, Cin)
    xr = xr.astype(jnp.bfloat16)

    M = N * Ho * Wo
    x_bytes = 2                                    # bf16 input stream
    o_bytes = jnp.dtype(out_dtype).itemsize

    # Per output-row VMEM: double-buffered x, double-buffered out, ~2 live f32
    # temporaries of the (K*TM, CoutP) matmul result.  Budget sized so the
    # pipeline fits comfortably under v7x's smaller scoped VMEM.
    per_row = 2 * K * Cin * x_bytes + 2 * CoutP * o_bytes + 2 * K * CoutP * 4
    budget = 16 * 1024 * 1024
    if tile_rows is not None:
        TM = tile_rows
    else:
        TM = _pick_tile_rows(M, per_row, budget)
    grid = (pl.cdiv(M, TM),)

    cost = pl.CostEstimate(
        flops=2 * K * M * Cin * CoutP,
        transcendentals=0,
        bytes_accessed=(K * M * Cin * x_bytes
                        + Cin * CoutP * 2 + CoutP * 4
                        + M * CoutP * o_bytes),
    )

    out = pl.pallas_call(
        _transition_kernel,
        out_shape=jax.ShapeDtypeStruct((M, CoutP), out_dtype),
        grid=grid,
        in_specs=[
            pl.BlockSpec((K, TM, Cin), lambda i: (0, i, 0)),
            pl.BlockSpec((Cin, CoutP), lambda i: (0, 0)),
            pl.BlockSpec((1, CoutP), lambda i: (0, 0)),
        ],
        out_specs=pl.BlockSpec((TM, CoutP), lambda i: (i, 0)),
        compiler_params=pltpu.CompilerParams(
            dimension_semantics=("parallel",),
            vmem_limit_bytes=40 * 1024 * 1024,
        ),
        cost_estimate=cost,
    )(xr, wt, bias2)

    # Slice off Cout padding, (M, Cout) -> NCHW.
    out = out[:, :Cout]
    out_nhwc = out.reshape(N, Ho, Wo, Cout)
    return jnp.transpose(out_nhwc, (0, 3, 1, 2))


def _reference_forward(x, w, g, b, m, v, with_pooling=True, eps=1e-5):
    """Pure-JAX f32 reference (mirrors the PyTorch module in eval mode)."""
    y = jnp.einsum('nchw,oc->nohw', x, w.reshape(w.shape[0], w.shape[1]))
    scale = g / jnp.sqrt(v + eps)
    y = y * scale[None, :, None, None] + (b - m * scale)[None, :, None, None]
    y = jnp.maximum(y, 0.0)
    if with_pooling:
        N, C, H, W = y.shape
        y = y.reshape(N, C, H // 2, 2, W // 2, 2).mean(axis=(3, 5))
    return y


if __name__ == "__main__":
    key = jax.random.PRNGKey(0)
    k_x, k_w, k_g, k_b, k_m, k_v = jax.random.split(key, 6)

    N, Cin, Cout, H, W = 2, 4, 8, 16, 16

    x = jax.random.normal(k_x, (N, Cin, H, W), dtype=jnp.float32)
    # nn.Conv2d(inp, oup, 1, 1, 0, bias=False) weight: (Cout, Cin, 1, 1)
    conv_w = jax.random.normal(k_w, (Cout, Cin, 1, 1), dtype=jnp.float32) * 0.5
    # nn.BatchNorm2d(oup) parameters / running stats (eval-mode semantics)
    bn_gamma = jax.random.uniform(k_g, (Cout,), minval=0.5, maxval=1.5)
    bn_beta = jax.random.normal(k_b, (Cout,)) * 0.1
    bn_mean = jax.random.normal(k_m, (Cout,)) * 0.1
    bn_var = jax.random.uniform(k_v, (Cout,), minval=0.5, maxval=1.5)

    # bf16 MXU inputs vs f32 reference -> loose tolerance (still catches any
    # BN-fold / pooling / tiling bug, which would produce O(1) errors).
    ATOL = RTOL = 1e-1

    # 1) with pooling, default tile size.
    out = transition_block(x, conv_w, bn_gamma, bn_beta, bn_mean, bn_var,
                           with_pooling=True)
    out = jax.block_until_ready(out)
    ref = _reference_forward(x, conv_w, bn_gamma, bn_beta, bn_mean, bn_var,
                             with_pooling=True)
    assert out.shape == (N, Cout, H // 2, W // 2), out.shape
    assert jnp.allclose(out, ref, atol=ATOL, rtol=RTOL), "pooling mismatch"

    # 2) with pooling, forced small tile -> exercises the multi-step grid path.
    out2 = transition_block(x, conv_w, bn_gamma, bn_beta, bn_mean, bn_var,
                            with_pooling=True, tile_rows=32)
    out2 = jax.block_until_ready(out2)
    assert jnp.allclose(out2, ref, atol=ATOL, rtol=RTOL), "tiled-grid mismatch"

    # 3) without pooling.
    out3 = transition_block(x, conv_w, bn_gamma, bn_beta, bn_mean, bn_var,
                            with_pooling=False)
    out3 = jax.block_until_ready(out3)
    ref3 = _reference_forward(x, conv_w, bn_gamma, bn_beta, bn_mean, bn_var,
                              with_pooling=False)
    assert out3.shape == (N, Cout, H, W), out3.shape
    assert jnp.allclose(out3, ref3, atol=ATOL, rtol=RTOL), "no-pool mismatch"

    print("KERNEL_OK")
</pallas_src>

<mosaic_0001>
module attributes {stable_mosaic.version = 11 : i64} {
  func.func @_transition_kernel(%arg0: i32, %arg1: memref<4x128x4xbf16, #tpu.memory_space<vmem>>, %arg2: memref<4x128xbf16, #tpu.memory_space<vmem>>, %arg3: memref<1x128xf32, #tpu.memory_space<vmem>>, %arg4: memref<128x128xf32, #tpu.memory_space<vmem>>) attributes {dimension_semantics = [#tpu.dimension_semantics<parallel>], iteration_bounds = array<i64: 1>, scalar_prefetch = 0 : i64, scratch_operands = 0 : i64, tpu.core_type = #tpu.core_type<tc>, window_params = [{transform_indices = @transform_0, window_bounds = array<i64: 4, 128, 4>}, {pipeline_mode = #tpu.pipeline_mode<synchronous>, transform_indices = @transform_1, window_bounds = array<i64: 4, 128>}, {pipeline_mode = #tpu.pipeline_mode<synchronous>, transform_indices = @transform_2, window_bounds = array<i64: 1, 128>}, {transform_indices = @transform_3, window_bounds = array<i64: 128, 128>}]} {
    %c0 = arith.constant 0 : index
    %c0_0 = arith.constant 0 : index
    %c0_1 = arith.constant 0 : index
    %0 = vector.load %arg1[%c0, %c0_0, %c0_1] : memref<4x128x4xbf16, #tpu.memory_space<vmem>>, vector<4x128x4xbf16>
    %1 = vector.shape_cast %0 : vector<4x128x4xbf16> to vector<512x4xbf16>
    %c0_2 = arith.constant 0 : index
    %c0_3 = arith.constant 0 : index
    %2 = vector.load %arg2[%c0_2, %c0_3] : memref<4x128xbf16, #tpu.memory_space<vmem>>, vector<4x128xbf16>
    %cst = arith.constant dense<0.000000e+00> : vector<512x128xf32>
    %3 = tpu.matmul %1, %2, %cst {dimension_numbers = #tpu.dot_dimension_numbers<[1], [0], [0], [1], [0, 0, 1, 1], [], []>} : vector<512x4xbf16>, vector<4x128xbf16>, vector<512x128xf32> -> vector<512x128xf32>
    %c0_4 = arith.constant 0 : index
    %c0_5 = arith.constant 0 : index
    %4 = vector.load %arg3[%c0_4, %c0_5] : memref<1x128xf32, #tpu.memory_space<vmem>>, vector<1x128xf32>
    %5 = vector.broadcast %4 : vector<1x128xf32> to vector<512x128xf32>
    %6 = arith.addf %3, %5 : vector<512x128xf32>
    %cst_6 = arith.constant 0.000000e+00 : f32
    %7 = vector.broadcast %cst_6 : f32 to vector<512x128xf32>
    %8 = arith.maximumf %6, %7 : vector<512x128xf32>
    %9 = vector.extract_strided_slice %8 {offsets = [0, 0], sizes = [128, 128], strides = [1, 1]} : vector<512x128xf32> to vector<128x128xf32>
    %10 = vector.extract_strided_slice %8 {offsets = [128, 0], sizes = [128, 128], strides = [1, 1]} : vector<512x128xf32> to vector<128x128xf32>
    %11 = arith.addf %9, %10 : vector<128x128xf32>
    %12 = vector.extract_strided_slice %8 {offsets = [256, 0], sizes = [128, 128], strides = [1, 1]} : vector<512x128xf32> to vector<128x128xf32>
    %13 = arith.addf %11, %12 : vector<128x128xf32>
    %14 = vector.extract_strided_slice %8 {offsets = [384, 0], sizes = [128, 128], strides = [1, 1]} : vector<512x128xf32> to vector<128x128xf32>
    %15 = arith.addf %13, %14 : vector<128x128xf32>
    %c0_7 = arith.constant 0 : index
    %c0_8 = arith.constant 0 : index
    %16 = vector.load %arg4[%c0_7, %c0_8] : memref<128x128xf32, #tpu.memory_space<vmem>>, vector<128x128xf32>
    tpu.vector_store %arg4[%c0_7, %c0_8], %15 {strides = array<i32>} : memref<128x128xf32, #tpu.memory_space<vmem>>, vector<128x128xf32>,
    return
  }
  func.func @transform_0(%arg0: i32) -> (i32, i32, i32) {
    %c0_i32 = arith.constant 0 : i32
    %c0_i32_0 = arith.constant 0 : i32
    %c0_i32_1 = arith.constant 0 : i32
    return %c0_i32, %arg0, %c0_i32_0 : i32, i32, i32
  }
  func.func @transform_1(%arg0: i32) -> (i32, i32) {
    %c0_i32 = arith.constant 0 : i32
    %c0_i32_0 = arith.constant 0 : i32
    %c0_i32_1 = arith.constant 0 : i32
    return %c0_i32, %c0_i32_0 : i32, i32
  }
  func.func @transform_2(%arg0: i32) -> (i32, i32) {
    %c0_i32 = arith.constant 0 : i32
    %c0_i32_0 = arith.constant 0 : i32
    %c0_i32_1 = arith.constant 0 : i32
    return %c0_i32, %c0_i32_0 : i32, i32
  }
  func.func @transform_3(%arg0: i32) -> (i32, i32) {
    %c0_i32 = arith.constant 0 : i32
    %c0_i32_0 = arith.constant 0 : i32
    return %arg0, %c0_i32 : i32, i32
  }
}

</mosaic_0001>

<llo_original>
// kernel: transition_block.1
$region0: #{transition_block.1}
  #allocation0 [shape = 'u32[]', space=smem, size = 0x4, offset = 0x4, fixed_abs, tag = 'smem constant byte address 0x4 - core index']
  #allocation1 [shape = 'u32[144,128]{1,0:T(1,128)}', space=vmem, size = 0x12000, scoped, tag = 'internal scratch']
  %s0 = inlined_call_operand.vmem [shape: bf16[4,128,4], index: 0, kind: input, shape index: {}]
  %s1 = inlined_call_operand.vmem [shape: bf16[4,128], index: 1, kind: input, shape index: {}]
  %s2 = inlined_call_operand.vmem [shape: f32[1,128], index: 2, kind: input, shape index: {}]
  %s3 = inlined_call_operand.vmem [shape: f32[128,128], index: 3, kind: output, shape index: {}]
  %s4 = sld [smem:[#allocation0]]
  $region22: #{transition_block.1} parent=0
    _
  %s6 = ssub.s32 1, %s4
  %s7 = scalar_select 0, %s6, %s4
  // Predicated region
  $region2: #{transition_block.1} parent=0 // pred_check
    _
  $region3: #{transition_block.1} parent=0 // pred_check_branch
    %9 = sbr.rel (0) target = $region5
  $region4: #{transition_block.1} parent=0 // pred_region
    _
  $region5: #{transition_block.1} parent=0 // pred_fallthru
    _
  // Predicated region
  $region6: #{transition_block.1} parent=0 // pred_check
    _
  $region7: #{transition_block.1} parent=0 // pred_check_branch
    %11 = sbr.rel (0) target = $region9
  $region8: #{transition_block.1} parent=0 // pred_region
    _
  $region9: #{transition_block.1} parent=0 // pred_fallthru
    _
  // Predicated region
  $region10: #{transition_block.1} parent=0 // pred_check
    _
  $region11: #{transition_block.1} parent=0 // pred_check_branch
    %13 = sbr.rel (0) target = $region13
  $region12: #{transition_block.1} parent=0 // pred_region
    _
  $region13: #{transition_block.1} parent=0 // pred_fallthru
    _
  %v15 = vld [vmem:[%s0] sm:$0xf]
  %v16 = vld [vmem:[%s0 + $0x4] sm:$0xf]
  %v17 = vld [vmem:[%s0 + $0x8] sm:$0xf]
  %v18 = vld [vmem:[%s0 + $0xc] sm:$0xf]
  %v19 = vld [vmem:[%s0 + $0x10] sm:$0xf]
  %v20 = vld [vmem:[%s0 + $0x14] sm:$0xf]
  %v21 = vld [vmem:[%s0 + $0x18] sm:$0xf]
  %v22 = vld [vmem:[%s0 + $0x1c] sm:$0xf]
  %v23 = vld [vmem:[%s0 + $0x20] sm:$0xf]
  %v24 = vld [vmem:[%s0 + $0x24] sm:$0xf]
  %v25 = vld [vmem:[%s0 + $0x28] sm:$0xf]
  %v26 = vld [vmem:[%s0 + $0x2c] sm:$0xf]
  %v27 = vld [vmem:[%s0 + $0x30] sm:$0xf]
  %v28 = vld [vmem:[%s0 + $0x34] sm:$0xf]
  %v29 = vld [vmem:[%s0 + $0x38] sm:$0xf]
  %v30 = vld [vmem:[%s0 + $0x3c] sm:$0xf]
  %v31 = vld [vmem:[%s0 + $0x40] sm:$0xf]
  %v32 = vld [vmem:[%s0 + $0x44] sm:$0xf]
  %v33 = vld [vmem:[%s0 + $0x48] sm:$0xf]
  %v34 = vld [vmem:[%s0 + $0x4c] sm:$0xf]
  %v35 = vld [vmem:[%s0 + $0x50] sm:$0xf]
  %v36 = vld [vmem:[%s0 + $0x54] sm:$0xf]
  %v37 = vld [vmem:[%s0 + $0x58] sm:$0xf]
  %v38 = vld [vmem:[%s0 + $0x5c] sm:$0xf]
  %v39 = vld [vmem:[%s0 + $0x60] sm:$0xf]
  %v40 = vld [vmem:[%s0 + $0x64] sm:$0xf]
  %v41 = vld [vmem:[%s0 + $0x68] sm:$0xf]
  %v42 = vld [vmem:[%s0 + $0x6c] sm:$0xf]
  %v43 = vld [vmem:[%s0 + $0x70] sm:$0xf]
  %v44 = vld [vmem:[%s0 + $0x74] sm:$0xf]
  %v45 = vld [vmem:[%s0 + $0x78] sm:$0xf]
  %v46 = vld [vmem:[%s0 + $0x7c] sm:$0xf]
  %v47 = vld [vmem:[%s0 + $0x80] sm:$0xf]
  %v48 = vld [vmem:[%s0 + $0x84] sm:$0xf]
  %v49 = vld [vmem:[%s0 + $0x88] sm:$0xf]
  %v50 = vld [vmem:[%s0 + $0x8c] sm:$0xf]
  %v51 = vld [vmem:[%s0 + $0x90] sm:$0xf]
  %v52 = vld [vmem:[%s0 + $0x94] sm:$0xf]
  %v53 = vld [vmem:[%s0 + $0x98] sm:$0xf]
  %v54 = vld [vmem:[%s0 + $0x9c] sm:$0xf]
  %v55 = vld [vmem:[%s0 + $0xa0] sm:$0xf]
  %v56 = vld [vmem:[%s0 + $0xa4] sm:$0xf]
  %v57 = vld [vmem:[%s0 + $0xa8] sm:$0xf]
  %v58 = vld [vmem:[%s0 + $0xac] sm:$0xf]
  %v59 = vld [vmem:[%s0 + $0xb0] sm:$0xf]
  %v60 = vld [vmem:[%s0 + $0xb4] sm:$0xf]
  %v61 = vld [vmem:[%s0 + $0xb8] sm:$0xf]
  %v62 = vld [vmem:[%s0 + $0xbc] sm:$0xf]
  %v63 = vld [vmem:[%s0 + $0xc0] sm:$0xf]
  %v64 = vld [vmem:[%s0 + $0xc4] sm:$0xf]
  %v65 = vld [vmem:[%s0 + $0xc8] sm:$0xf]
  %v66 = vld [vmem:[%s0 + $0xcc] sm:$0xf]
  %v67 = vld [vmem:[%s0 + $0xd0] sm:$0xf]
  %v68 = vld [vmem:[%s0 + $0xd4] sm:$0xf]
  %v69 = vld [vmem:[%s0 + $0xd8] sm:$0xf]
  %v70 = vld [vmem:[%s0 + $0xdc] sm:$0xf]
  %v71 = vld [vmem:[%s0 + $0xe0] sm:$0xf]
  %v72 = vld [vmem:[%s0 + $0xe4] sm:$0xf]
  %v73 = vld [vmem:[%s0 + $0xe8] sm:$0xf]
  %v74 = vld [vmem:[%s0 + $0xec] sm:$0xf]
  %v75 = vld [vmem:[%s0 + $0xf0] sm:$0xf]
  %v76 = vld [vmem:[%s0 + $0xf4] sm:$0xf]
  %v77 = vld [vmem:[%s0 + $0xf8] sm:$0xf]
  %v78 = vld [vmem:[%s0 + $0xfc] sm:$0xf]
  %v79 = vld [vmem:[%s1] sm:$0x3]
  %v80 = vld [vmem:[%s2] sm:$0x1]
  %v82 = vlaneseq
  %v83 = vshrl.u32 %v82, 7
  %v84 = vsub.s32 0, %v83
  %v85 = vrot.slane %v80, %v84
  %v151 = vunpack.c.l.b16 %v15
  %v152 = vunpack.c.l.b16 %v16
  %v153 = vunpack.c.l.b16 %v17
  %v154 = vunpack.c.l.b16 %v18
  %v155 = vunpack.c.l.b16 %v19
  %v156 = vunpack.c.l.b16 %v20
  %v157 = vunpack.c.l.b16 %v21
  %v158 = vunpack.c.l.b16 %v22
  %v159 = vunpack.c.l.b16 %v23
  %v160 = vunpack.c.l.b16 %v24
  %v161 = vunpack.c.l.b16 %v25
  %v162 = vunpack.c.l.b16 %v26
  %v163 = vunpack.c.l.b16 %v27
  %v164 = vunpack.c.l.b16 %v28
  %v165 = vunpack.c.l.b16 %v29
  %v166 = vunpack.c.l.b16 %v30
  %v167 = vunpack.c.l.b16 %v31
  %v168 = vunpack.c.l.b16 %v32
  %v169 = vunpack.c.l.b16 %v33
  %v170 = vunpack.c.l.b16 %v34
  %v171 = vunpack.c.l.b16 %v35
  %v172 = vunpack.c.l.b16 %v36
  %v173 = vunpack.c.l.b16 %v37
  %v174 = vunpack.c.l.b16 %v38
  %v175 = vunpack.c.l.b16 %v39
  %v176 = vunpack.c.l.b16 %v40
  %v177 = vunpack.c.l.b16 %v41
  %v178 = vunpack.c.l.b16 %v42
  %v179 = vunpack.c.l.b16 %v43
  %v180 = vunpack.c.l.b16 %v44
  %v181 = vunpack.c.l.b16 %v45
  %v182 = vunpack.c.l.b16 %v46
  %v183 = vunpack.c.l.b16 %v47
  %v184 = vunpack.c.l.b16 %v48
  %v185 = vunpack.c.l.b16 %v49
  %v186 = vunpack.c.l.b16 %v50
  %v187 = vunpack.c.l.b16 %v51
  %v188 = vunpack.c.l.b16 %v52
  %v189 = vunpack.c.l.b16 %v53
  %v190 = vunpack.c.l.b16 %v54
  %v191 = vunpack.c.l.b16 %v55
  %v192 = vunpack.c.l.b16 %v56
  %v193 = vunpack.c.l.b16 %v57
  %v194 = vunpack.c.l.b16 %v58
  %v195 = vunpack.c.l.b16 %v59
  %v196 = vunpack.c.l.b16 %v60
  %v197 = vunpack.c.l.b16 %v61
  %v198 = vunpack.c.l.b16 %v62
  %v199 = vunpack.c.l.b16 %v63
  %v200 = vunpack.c.l.b16 %v64
  %v201 = vunpack.c.l.b16 %v65
  %v202 = vunpack.c.l.b16 %v66
  %v203 = vunpack.c.l.b16 %v67
  %v204 = vunpack.c.l.b16 %v68
  %v205 = vunpack.c.l.b16 %v69
  %v206 = vunpack.c.l.b16 %v70
  %v207 = vunpack.c.l.b16 %v71
  %v208 = vunpack.c.l.b16 %v72
  %v209 = vunpack.c.l.b16 %v73
  %v210 = vunpack.c.l.b16 %v74
  %v211 = vunpack.c.l.b16 %v75
  %v212 = vunpack.c.l.b16 %v76
  %v213 = vunpack.c.l.b16 %v77
  %v214 = vunpack.c.l.b16 %v78
  %v215 = vpack.c.b16 %v152, %v151
  %v216 = vpack.c.b16 %v154, %v153
  %v217 = vpack.c.b16 %v156, %v155
  %v218 = vpack.c.b16 %v158, %v157
  %v219 = vpack.c.b16 %v160, %v159
  %v220 = vpack.c.b16 %v162, %v161
  %v221 = vpack.c.b16 %v164, %v163
  %v222 = vpack.c.b16 %v166, %v165
  %v223 = vpack.c.b16 %v168, %v167
  %v224 = vpack.c.b16 %v170, %v169
  %v225 = vpack.c.b16 %v172, %v171
  %v226 = vpack.c.b16 %v174, %v173
  %v227 = vpack.c.b16 %v176, %v175
  %v228 = vpack.c.b16 %v178, %v177
  %v229 = vpack.c.b16 %v180, %v179
  %v230 = vpack.c.b16 %v182, %v181
  %v231 = vpack.c.b16 %v184, %v183
  %v232 = vpack.c.b16 %v186, %v185
  %v233 = vpack.c.b16 %v188, %v187
  %v234 = vpack.c.b16 %v190, %v189
  %v235 = vpack.c.b16 %v192, %v191
  %v236 = vpack.c.b16 %v194, %v193
  %v237 = vpack.c.b16 %v196, %v195
  %v238 = vpack.c.b16 %v198, %v197
  %v239 = vpack.c.b16 %v200, %v199
  %v240 = vpack.c.b16 %v202, %v201
  %v241 = vpack.c.b16 %v204, %v203
  %v242 = vpack.c.b16 %v206, %v205
  %v243 = vpack.c.b16 %v208, %v207
  %v244 = vpack.c.b16 %v210, %v209
  %v245 = vpack.c.b16 %v212, %v211
  %v246 = vpack.c.b16 %v214, %v213
  %vm247 = vcmask 31744
  %v249 = vsel %vm247, %v215, 0
  %v252 = vsel %vm247, %v216, 0
  %v255 = vsel %vm247, %v217, 0
  %v258 = vsel %vm247, %v218, 0
  %v261 = vsel %vm247, %v219, 0
  %v264 = vsel %vm247, %v220, 0
  %v267 = vsel %vm247, %v221, 0
  %v270 = vsel %vm247, %v222, 0
  %v273 = vsel %vm247, %v223, 0
  %v276 = vsel %vm247, %v224, 0
  %v279 = vsel %vm247, %v225, 0
  %v282 = vsel %vm247, %v226, 0
  %v285 = vsel %vm247, %v227, 0
  %v288 = vsel %vm247, %v228, 0
  %v291 = vsel %vm247, %v229, 0
  %v294 = vsel %vm247, %v230, 0
  %v297 = vsel %vm247, %v231, 0
  %v300 = vsel %vm247, %v232, 0
  %v303 = vsel %vm247, %v233, 0
  %v306 = vsel %vm247, %v234, 0
  %v309 = vsel %vm247, %v235, 0
  %v312 = vsel %vm247, %v236, 0
  %v315 = vsel %vm247, %v237, 0
  %v318 = vsel %vm247, %v238, 0
  %v321 = vsel %vm247, %v239, 0
  %v324 = vsel %vm247, %v240, 0
  %v327 = vsel %vm247, %v241, 0
  %v330 = vsel %vm247, %v242, 0
  %v333 = vsel %vm247, %v243, 0
  %v336 = vsel %vm247, %v244, 0
  %v339 = vsel %vm247, %v245, 0
  %v342 = vsel %vm247, %v246, 0
  %vm344 = vcmask 1041408
  %v346 = vsel %vm344, %v79, 0
  %348 = vmatprep.subr.bf16.mxu0 0
  %349 = vmatpush1.bf16.msra.mxu0 0
  %350 = vmatprep.subr.bf16.mxu0 0
  %351 = vmatpush1.bf16.msra.mxu0 0
  %352 = vmatprep.subr.bf16.mxu0 0
  %353 = vmatpush1.bf16.msra.mxu0 0
  %354 = vmatprep.subr.bf16.mxu0 0
  %355 = vmatpush1.bf16.msra.mxu0 0
  %356 = vmatprep.subr.bf16.mxu0 0
  %357 = vmatpush1.bf16.msra.mxu0 0
  %358 = vmatprep.subr.bf16.mxu0 0
  %359 = vmatpush1.bf16.msra.mxu0 0
  %360 = vmatprep.subr.bf16.mxu0 0
  %361 = vmatpush1.bf16.msra.mxu0 0
  %362 = vmatprep.subr.bf16.mxu0 0
  %363 = vmatpush1.bf16.msra.mxu0 %v346
  %364 = vmatprep.subr.bf16.mxu0 0
  %365 = vmatpush2.bf16.msra.mxu0 0
  %366 = vmatprep.subr.bf16.mxu0 0
  %367 = vmatpush2.bf16.msra.mxu0 0
  %368 = vmatprep.subr.bf16.mxu0 0
  %369 = vmatpush2.bf16.msra.mxu0 0
  %370 = vmatprep.subr.bf16.mxu0 0
  %371 = vmatpush2.bf16.msra.mxu0 0
  %372 = vmatprep.subr.bf16.mxu0 0
  %373 = vmatpush2.bf16.msra.mxu0 0
  %374 = vmatprep.subr.bf16.mxu0 0
  %375 = vmatpush2.bf16.msra.mxu0 0
  %376 = vmatprep.subr.bf16.mxu0 0
  %377 = vmatpush2.bf16.msra.mxu0 0
  %378 = vmatprep.subr.bf16.mxu0 0
  %379 = vmatpush2.bf16.msra.mxu0 0
  %380 = vmatprep.mubr.bf16.mxu0 0
  %381 = vmatmul.mubr.bf16.gmra.mxu0 %v249
  %v382 = vpop.f32.mrf.mxu0
  %v383 = vadd.f32 %v85, %v382
  %v384 = vpop.f32.mrf.mxu0
  %v385 = vpop.f32.mrf.mxu0
  %v386 = vadd.f32 %v85, %v385
  %v387 = vpop.f32.mrf.mxu0
  %388 = vmatprep.mubr.bf16.mxu0 0
  %389 = vmatmul.mubr.bf16.gmra.mxu0 %v252
  %v390 = vpop.f32.mrf.mxu0
  %v391 = vadd.f32 %v85, %v390
  %v392 = vpop.f32.mrf.mxu0
  %v393 = vpop.f32.mrf.mxu0
  %v394 = vadd.f32 %v85, %v393
  %v395 = vpop.f32.mrf.mxu0
  %396 = vmatprep.mubr.bf16.mxu0 0
  %397 = vmatmul.mubr.bf16.gmra.mxu0 %v255
  %v398 = vpop.f32.mrf.mxu0
  %v399 = vadd.f32 %v85, %v398
  %v400 = vpop.f32.mrf.mxu0
  %v401 = vpop.f32.mrf.mxu0
  %v402 = vadd.f32 %v85, %v401
  %v403 = vpop.f32.mrf.mxu0
  %404 = vmatprep.mubr.bf16.mxu0 0
  %405 = vmatmul.mubr.bf16.gmra.mxu0 %v258
  %v406 = vpop.f32.mrf.mxu0
  %v407 = vadd.f32 %v85, %v406
  %v408 = vpop.f32.mrf.mxu0
  %v409 = vpop.f32.mrf.mxu0
  %v410 = vadd.f32 %v85, %v409
  %v411 = vpop.f32.mrf.mxu0
  %412 = vmatprep.mubr.bf16.mxu0 0
  %413 = vmatmul.mubr.bf16.gmra.mxu0 %v261
  %v414 = vpop.f32.mrf.mxu0
  %v415 = vadd.f32 %v85, %v414
  %v416 = vpop.f32.mrf.mxu0
  %v417 = vpop.f32.mrf.mxu0
  %v418 = vadd.f32 %v85, %v417
  %v419 = vpop.f32.mrf.mxu0
  %420 = vmatprep.mubr.bf16.mxu0 0
  %421 = vmatmul.mubr.bf16.gmra.mxu0 %v264
  %v422 = vpop.f32.mrf.mxu0
  %v423 = vadd.f32 %v85, %v422
  %v424 = vpop.f32.mrf.mxu0
  %v425 = vpop.f32.mrf.mxu0
  %v426 = vadd.f32 %v85, %v425
  %v427 = vpop.f32.mrf.mxu0
  %428 = vmatprep.mubr.bf16.mxu0 0
  %429 = vmatmul.mubr.bf16.gmra.mxu0 %v267
  %v430 = vpop.f32.mrf.mxu0
  %v431 = vadd.f32 %v85, %v430
  %v432 = vpop.f32.mrf.mxu0
  %v433 = vpop.f32.mrf.mxu0
  %v434 = vadd.f32 %v85, %v433
  %v435 = vpop.f32.mrf.mxu0
  %436 = vmatprep.mubr.bf16.mxu0 0
  %437 = vmatmul.mubr.bf16.gmra.mxu0 %v270
  %v438 = vpop.f32.mrf.mxu0
  %v439 = vadd.f32 %v85, %v438
  %v440 = vpop.f32.mrf.mxu0
  %v441 = vpop.f32.mrf.mxu0
  %v442 = vadd.f32 %v85, %v441
  %v443 = vpop.f32.mrf.mxu0
  %444 = vmatprep.mubr.bf16.mxu0 0
  %445 = vmatmul.mubr.bf16.gmra.mxu0 %v273
  %v446 = vpop.f32.mrf.mxu0
  %v447 = vadd.f32 %v85, %v446
  %v448 = vpop.f32.mrf.mxu0
  %v449 = vpop.f32.mrf.mxu0
  %v450 = vadd.f32 %v85, %v449
  %v451 = vpop.f32.mrf.mxu0
  %452 = vmatprep.mubr.bf16.mxu0 0
  %453 = vmatmul.mubr.bf16.gmra.mxu0 %v276
  %v454 = vpop.f32.mrf.mxu0
  %v455 = vadd.f32 %v85, %v454
  %v456 = vpop.f32.mrf.mxu0
  %v457 = vpop.f32.mrf.mxu0
  %v458 = vadd.f32 %v85, %v457
  %v459 = vpop.f32.mrf.mxu0
  %460 = vmatprep.mubr.bf16.mxu0 0
  %461 = vmatmul.mubr.bf16.gmra.mxu0 %v279
  %v462 = vpop.f32.mrf.mxu0
  %v463 = vadd.f32 %v85, %v462
  %v464 = vpop.f32.mrf.mxu0
  %v465 = vpop.f32.mrf.mxu0
  %v466 = vadd.f32 %v85, %v465
  %v467 = vpop.f32.mrf.mxu0
  %468 = vmatprep.mubr.bf16.mxu0 0
  %469 = vmatmul.mubr.bf16.gmra.mxu0 %v282
  %v470 = vpop.f32.mrf.mxu0
  %v471 = vadd.f32 %v85, %v470
  %v472 = vpop.f32.mrf.mxu0
  %v473 = vpop.f32.mrf.mxu0
  %v474 = vadd.f32 %v85, %v473
  %v475 = vpop.f32.mrf.mxu0
  %476 = vmatprep.mubr.bf16.mxu0 0
  %477 = vmatmul.mubr.bf16.gmra.mxu0 %v285
  %v478 = vpop.f32.mrf.mxu0
  %v479 = vadd.f32 %v85, %v478
  %v480 = vpop.f32.mrf.mxu0
  %v481 = vpop.f32.mrf.mxu0
  %v482 = vadd.f32 %v85, %v481
  %v483 = vpop.f32.mrf.mxu0
  %484 = vmatprep.mubr.bf16.mxu0 0
  %485 = vmatmul.mubr.bf16.gmra.mxu0 %v288
  %v486 = vpop.f32.mrf.mxu0
  %v487 = vadd.f32 %v85, %v486
  %v488 = vpop.f32.mrf.mxu0
  %v489 = vpop.f32.mrf.mxu0
  %v490 = vadd.f32 %v85, %v489
  %v491 = vpop.f32.mrf.mxu0
  %492 = vmatprep.mubr.bf16.mxu0 0
  %493 = vmatmul.mubr.bf16.gmra.mxu0 %v291
  %v494 = vpop.f32.mrf.mxu0
  %v495 = vadd.f32 %v85, %v494
  %v496 = vpop.f32.mrf.mxu0
  %v497 = vpop.f32.mrf.mxu0
  %v498 = vadd.f32 %v85, %v497
  %v499 = vpop.f32.mrf.mxu0
  %500 = vmatprep.mubr.bf16.mxu0 0
  %501 = vmatmul.mubr.bf16.gmra.mxu0 %v294
  %v502 = vpop.f32.mrf.mxu0
  %v503 = vadd.f32 %v85, %v502
  %v504 = vpop.f32.mrf.mxu0
  %v505 = vpop.f32.mrf.mxu0
  %v506 = vadd.f32 %v85, %v505
  %v507 = vpop.f32.mrf.mxu0
  %508 = vmatprep.mubr.bf16.mxu0 0
  %509 = vmatmul.mubr.bf16.gmra.mxu0 %v297
  %v510 = vpop.f32.mrf.mxu0
  %v511 = vadd.f32 %v85, %v510
  %v512 = vpop.f32.mrf.mxu0
  %v513 = vpop.f32.mrf.mxu0
  %v514 = vadd.f32 %v85, %v513
  %v515 = vpop.f32.mrf.mxu0
  %516 = vmatprep.mubr.bf16.mxu0 0
  %517 = vmatmul.mubr.bf16.gmra.mxu0 %v300
  %v518 = vpop.f32.mrf.mxu0
  %v519 = vadd.f32 %v85, %v518
  %v520 = vpop.f32.mrf.mxu0
  %v521 = vpop.f32.mrf.mxu0
  %v522 = vadd.f32 %v85, %v521
  %v523 = vpop.f32.mrf.mxu0
  %524 = vmatprep.mubr.bf16.mxu0 0
  %525 = vmatmul.mubr.bf16.gmra.mxu0 %v303
  %v526 = vpop.f32.mrf.mxu0
  %v527 = vadd.f32 %v85, %v526
  %v528 = vpop.f32.mrf.mxu0
  %v529 = vpop.f32.mrf.mxu0
  %v530 = vadd.f32 %v85, %v529
  %v531 = vpop.f32.mrf.mxu0
  %532 = vmatprep.mubr.bf16.mxu0 0
  %533 = vmatmul.mubr.bf16.gmra.mxu0 %v306
  %v534 = vpop.f32.mrf.mxu0
  %v535 = vadd.f32 %v85, %v534
  %v536 = vpop.f32.mrf.mxu0
  %v537 = vpop.f32.mrf.mxu0
  %v538 = vadd.f32 %v85, %v537
  %v539 = vpop.f32.mrf.mxu0
  %540 = vmatprep.mubr.bf16.mxu0 0
  %541 = vmatmul.mubr.bf16.gmra.mxu0 %v309
  %v542 = vpop.f32.mrf.mxu0
  %v543 = vadd.f32 %v85, %v542
  %v544 = vpop.f32.mrf.mxu0
  %v545 = vpop.f32.mrf.mxu0
  %v546 = vadd.f32 %v85, %v545
  %v547 = vpop.f32.mrf.mxu0
  %548 = vmatprep.mubr.bf16.mxu0 0
  %549 = vmatmul.mubr.bf16.gmra.mxu0 %v312
  %v550 = vpop.f32.mrf.mxu0
  %v551 = vadd.f32 %v85, %v550
  %v552 = vpop.f32.mrf.mxu0
  %v553 = vpop.f32.mrf.mxu0
  %v554 = vadd.f32 %v85, %v553
  %v555 = vpop.f32.mrf.mxu0
  %556 = vmatprep.mubr.bf16.mxu0 0
  %557 = vmatmul.mubr.bf16.gmra.mxu0 %v315
  %v558 = vpop.f32.mrf.mxu0
  %v559 = vadd.f32 %v85, %v558
  %v560 = vpop.f32.mrf.mxu0
  %v561 = vpop.f32.mrf.mxu0
  %v562 = vadd.f32 %v85, %v561
  %v563 = vpop.f32.mrf.mxu0
  %564 = vmatprep.mubr.bf16.mxu0 0
  %565 = vmatmul.mubr.bf16.gmra.mxu0 %v318
  %v566 = vpop.f32.mrf.mxu0
  %v567 = vadd.f32 %v85, %v566
  %v568 = vpop.f32.mrf.mxu0
  %v569 = vpop.f32.mrf.mxu0
  %v570 = vadd.f32 %v85, %v569
  %v571 = vpop.f32.mrf.mxu0
  %572 = vmatprep.mubr.bf16.mxu0 0
  %573 = vmatmul.mubr.bf16.gmra.mxu0 %v321
  %v574 = vpop.f32.mrf.mxu0
  %v575 = vadd.f32 %v85, %v574
  %v576 = vpop.f32.mrf.mxu0
  %v577 = vpop.f32.mrf.mxu0
  %v578 = vadd.f32 %v85, %v577
  %v579 = vpop.f32.mrf.mxu0
  %580 = vmatprep.mubr.bf16.mxu0 0
  %581 = vmatmul.mubr.bf16.gmra.mxu0 %v324
  %v582 = vpop.f32.mrf.mxu0
  %v583 = vadd.f32 %v85, %v582
  %v584 = vpop.f32.mrf.mxu0
  %v585 = vpop.f32.mrf.mxu0
  %v586 = vadd.f32 %v85, %v585
  %v587 = vpop.f32.mrf.mxu0
  %588 = vmatprep.mubr.bf16.mxu0 0
  %589 = vmatmul.mubr.bf16.gmra.mxu0 %v327
  %v590 = vpop.f32.mrf.mxu0
  %v591 = vadd.f32 %v85, %v590
  %v592 = vpop.f32.mrf.mxu0
  %v593 = vpop.f32.mrf.mxu0
  %v594 = vadd.f32 %v85, %v593
  %v595 = vpop.f32.mrf.mxu0
  %596 = vmatprep.mubr.bf16.mxu0 0
  %597 = vmatmul.mubr.bf16.gmra.mxu0 %v330
  %v598 = vpop.f32.mrf.mxu0
  %v599 = vadd.f32 %v85, %v598
  %v600 = vpop.f32.mrf.mxu0
  %v601 = vpop.f32.mrf.mxu0
  %v602 = vadd.f32 %v85, %v601
  %v603 = vpop.f32.mrf.mxu0
  %604 = vmatprep.mubr.bf16.mxu0 0
  %605 = vmatmul.mubr.bf16.gmra.mxu0 %v333
  %v606 = vpop.f32.mrf.mxu0
  %v607 = vadd.f32 %v85, %v606
  %v608 = vpop.f32.mrf.mxu0
  %v609 = vpop.f32.mrf.mxu0
  %v610 = vadd.f32 %v85, %v609
  %v611 = vpop.f32.mrf.mxu0
  %612 = vmatprep.mubr.bf16.mxu0 0
  %613 = vmatmul.mubr.bf16.gmra.mxu0 %v336
  %v614 = vpop.f32.mrf.mxu0
  %v615 = vadd.f32 %v85, %v614
  %v616 = vpop.f32.mrf.mxu0
  %v617 = vpop.f32.mrf.mxu0
  %v618 = vadd.f32 %v85, %v617
  %v619 = vpop.f32.mrf.mxu0
  %620 = vmatprep.mubr.bf16.mxu0 0
  %621 = vmatmul.mubr.bf16.gmra.mxu0 %v339
  %v622 = vpop.f32.mrf.mxu0
  %v623 = vadd.f32 %v85, %v622
  %v624 = vpop.f32.mrf.mxu0
  %v625 = vpop.f32.mrf.mxu0
  %v626 = vadd.f32 %v85, %v625
  %v627 = vpop.f32.mrf.mxu0
  %628 = vmatprep.mubr.bf16.mxu0 0
  %629 = vmatmul.mubr.bf16.gmra.mxu0 %v342
  %v630 = vpop.f32.mrf.mxu0
  %v631 = vadd.f32 %v85, %v630
  %v632 = vpop.f32.mrf.mxu0
  %v633 = vpop.f32.mrf.mxu0
  %v634 = vadd.f32 %v85, %v633
  %v635 = vpop.f32.mrf.mxu0
  %636 = vdwg.mxu0
  %v637 = vmax.f32 %v383, 0.0
  %v638 = vmax.f32 %v386, 0.0
  %v639 = vmax.f32 %v391, 0.0
  %v640 = vmax.f32 %v394, 0.0
  %v641 = vmax.f32 %v399, 0.0
  %v642 = vmax.f32 %v402, 0.0
  %v643 = vmax.f32 %v407, 0.0
  %v644 = vmax.f32 %v410, 0.0
  %v645 = vmax.f32 %v415, 0.0
  %v646 = vmax.f32 %v418, 0.0
  %v647 = vmax.f32 %v423, 0.0
  %v648 = vmax.f32 %v426, 0.0
  %v649 = vmax.f32 %v431, 0.0
  %v650 = vmax.f32 %v434, 0.0
  %v651 = vmax.f32 %v439, 0.0
  %v652 = vmax.f32 %v442, 0.0
  %v653 = vmax.f32 %v447, 0.0
  %v654 = vmax.f32 %v450, 0.0
  %v655 = vmax.f32 %v455, 0.0
  %v656 = vmax.f32 %v458, 0.0
  %v657 = vmax.f32 %v463, 0.0
  %v658 = vmax.f32 %v466, 0.0
  %v659 = vmax.f32 %v471, 0.0
  %v660 = vmax.f32 %v474, 0.0
  %v661 = vmax.f32 %v479, 0.0
  %v662 = vmax.f32 %v482, 0.0
  %v663 = vmax.f32 %v487, 0.0
  %v664 = vmax.f32 %v490, 0.0
  %v665 = vmax.f32 %v495, 0.0
  %v666 = vmax.f32 %v498, 0.0
  %v667 = vmax.f32 %v503, 0.0
  %v668 = vmax.f32 %v506, 0.0
  %v669 = vmax.f32 %v511, 0.0
  %v670 = vmax.f32 %v514, 0.0
  %v671 = vmax.f32 %v519, 0.0
  %v672 = vmax.f32 %v522, 0.0
  %v673 = vmax.f32 %v527, 0.0
  %v674 = vmax.f32 %v530, 0.0
  %v675 = vmax.f32 %v535, 0.0
  %v676 = vmax.f32 %v538, 0.0
  %v677 = vmax.f32 %v543, 0.0
  %v678 = vmax.f32 %v546, 0.0
  %v679 = vmax.f32 %v551, 0.0
  %v680 = vmax.f32 %v554, 0.0
  %v681 = vmax.f32 %v559, 0.0
  %v682 = vmax.f32 %v562, 0.0
  %v683 = vmax.f32 %v567, 0.0
  %v684 = vmax.f32 %v570, 0.0
  %v685 = vmax.f32 %v575, 0.0
  %v686 = vmax.f32 %v578, 0.0
  %v687 = vmax.f32 %v583, 0.0
  %v688 = vmax.f32 %v586, 0.0
  %v689 = vmax.f32 %v591, 0.0
  %v690 = vmax.f32 %v594, 0.0
  %v691 = vmax.f32 %v599, 0.0
  %v692 = vmax.f32 %v602, 0.0
  %v693 = vmax.f32 %v607, 0.0
  %v694 = vmax.f32 %v610, 0.0
  %v695 = vmax.f32 %v615, 0.0
  %v696 = vmax.f32 %v618, 0.0
  %v697 = vmax.f32 %v623, 0.0
  %v698 = vmax.f32 %v626, 0.0
  %v699 = vmax.f32 %v631, 0.0
  %v700 = vmax.f32 %v634, 0.0
  %v701 = vadd.f32 %v637, %v653
  %v702 = vadd.f32 %v638, %v654
  %v703 = vadd.f32 %v639, %v655
  %v704 = vadd.f32 %v640, %v656
  %v705 = vadd.f32 %v641, %v657
  %v706 = vadd.f32 %v642, %v658
  %v707 = vadd.f32 %v643, %v659
  %v708 = vadd.f32 %v644, %v660
  %v709 = vadd.f32 %v645, %v661
  %v710 = vadd.f32 %v646, %v662
  %v711 = vadd.f32 %v647, %v663
  %v712 = vadd.f32 %v648, %v664
  %v713 = vadd.f32 %v649, %v665
  %v714 = vadd.f32 %v650, %v666
  %v715 = vadd.f32 %v651, %v667
  %v716 = vadd.f32 %v652, %v668
  %v717 = vadd.f32 %v701, %v669
  %v718 = vadd.f32 %v702, %v670
  %v719 = vadd.f32 %v703, %v671
  %v720 = vadd.f32 %v704, %v672
  %v721 = vadd.f32 %v705, %v673
  %v722 = vadd.f32 %v706, %v674
  %v723 = vadd.f32 %v707, %v675
  %v724 = vadd.f32 %v708, %v676
  %v725 = vadd.f32 %v709, %v677
  %v726 = vadd.f32 %v710, %v678
  %v727 = vadd.f32 %v711, %v679
  %v728 = vadd.f32 %v712, %v680
  %v729 = vadd.f32 %v713, %v681
  %v730 = vadd.f32 %v714, %v682
  %v731 = vadd.f32 %v715, %v683
  %v732 = vadd.f32 %v716, %v684
  %v733 = vadd.f32 %v717, %v685
  %v734 = vadd.f32 %v718, %v686
  %v735 = vadd.f32 %v719, %v687
  %v736 = vadd.f32 %v720, %v688
  %v737 = vadd.f32 %v721, %v689
  %v738 = vadd.f32 %v722, %v690
  %v739 = vadd.f32 %v723, %v691
  %v740 = vadd.f32 %v724, %v692
  %v741 = vadd.f32 %v725, %v693
  %v742 = vadd.f32 %v726, %v694
  %v743 = vadd.f32 %v727, %v695
  %v744 = vadd.f32 %v728, %v696
  %v745 = vadd.f32 %v729, %v697
  %v746 = vadd.f32 %v730, %v698
  %v747 = vadd.f32 %v731, %v699
  %v748 = vadd.f32 %v732, %v700
  %749 = vst [vmem:[%s3] sm:$0xff] %v733
  %750 = vst [vmem:[%s3 + $0x8] sm:$0xff] %v734
  %751 = vst [vmem:[%s3 + $0x10] sm:$0xff] %v735
  %752 = vst [vmem:[%s3 + $0x18] sm:$0xff] %v736
  %753 = vst [vmem:[%s3 + $0x20] sm:$0xff] %v737
  %754 = vst [vmem:[%s3 + $0x28] sm:$0xff] %v738
  %755 = vst [vmem:[%s3 + $0x30] sm:$0xff] %v739
  %756 = vst [vmem:[%s3 + $0x38] sm:$0xff] %v740
  %757 = vst [vmem:[%s3 + $0x40] sm:$0xff] %v741
  %758 = vst [vmem:[%s3 + $0x48] sm:$0xff] %v742
  %759 = vst [vmem:[%s3 + $0x50] sm:$0xff] %v743
  %760 = vst [vmem:[%s3 + $0x58] sm:$0xff] %v744
  %761 = vst [vmem:[%s3 + $0x60] sm:$0xff] %v745
  %762 = vst [vmem:[%s3 + $0x68] sm:$0xff] %v746
  %763 = vst [vmem:[%s3 + $0x70] sm:$0xff] %v747
  %764 = vst [vmem:[%s3 + $0x78] sm:$0xff] %v748
  // Predicated region
  $region14: #{transition_block.1} parent=0 // pred_check
    _
  $region15: #{transition_block.1} parent=0 // pred_check_branch
    %766 = sbr.rel (0) target = $region17
  $region16: #{transition_block.1} parent=0 // pred_region
    _
  $region17: #{transition_block.1} parent=0 // pred_fallthru
    _
  // Predicated region
  $region18: #{transition_block.1} parent=0 // pred_check
    _
  $region19: #{transition_block.1} parent=0 // pred_check_branch
    %768 = sbr.rel (0) target = $region21
  $region20: #{transition_block.1} parent=0 // pred_region
    _
  $region21: #{transition_block.1} parent=0 // pred_fallthru
    _

</llo_original>
